<compile_context>
chip_gen: v5e
topology: v5e:2x2
jax: 0.10.0
libtpu: 0.0.40
codegen_flags: <defaults>
</compile_context>

<pallas_src>
import jax
import jax.numpy as jnp
from jax.experimental import pallas as pl
from jax.experimental.pallas import tpu as pltpu


def _dimconvert_kernel(x_ref, w_ref, pb_ref, o_ref):
    # Pointwise conv (+ folded BN scale) on the MXU; accumulate in f32.
    y = jnp.dot(x_ref[...], w_ref[...], preferred_element_type=jnp.float32)
    pb = pb_ref[...].astype(jnp.float32)           # (2, C_pad): row 0 = bias, row 1 = alpha
    bias = pb[0:1, :]
    alpha = pb[1:2, :]
    y = y + bias                                   # folded BatchNorm1d (inference)
    y = jnp.where(y >= 0.0, y, alpha * y)          # PReLU, per-channel alpha
    # Dropout(0.1): identity in eval mode.
    o_ref[...] = y.astype(o_ref.dtype)


def dim_convert(x, w, gamma, beta, running_mean, running_var, alpha,
                *, eps=1e-5, tile_m=512, matmul_dtype=None):
    """x: (B, T, C_in) -> (B, T, C_out).

    w is the Conv1d weight stored as (C_in, C_out) (PyTorch stores (C_out, C_in, 1)).
    matmul_dtype: optionally cast x / folded weight to e.g. jnp.bfloat16 for the MXU
    (accumulation and epilogue stay f32).
    """
    B, T, C_in = x.shape
    C_out = w.shape[1]
    M = B * T
    out_dtype = x.dtype

    # ---- Fold BatchNorm1d (inference) into the conv weight and a bias (one-time) ----
    scale = gamma.astype(jnp.float32) * jax.lax.rsqrt(running_var.astype(jnp.float32) + eps)
    w_folded = w.astype(jnp.float32) * scale[None, :]                 # (C_in, C_out)
    bias = beta.astype(jnp.float32) - running_mean.astype(jnp.float32) * scale  # (C_out,)

    # ---- Lane-dense output: pad C_out up to a multiple of 128 (zero columns) ----
    C_pad = ((C_out + 127) // 128) * 128
    if C_pad != C_out:
        w_folded = jnp.pad(w_folded, ((0, 0), (0, C_pad - C_out)))
        bias = jnp.pad(bias, (0, C_pad - C_out))
        alpha_p = jnp.pad(alpha.astype(jnp.float32), (0, C_pad - C_out))
    else:
        alpha_p = alpha.astype(jnp.float32)

    x2 = x.reshape(M, C_in)
    if matmul_dtype is not None:
        x2 = x2.astype(matmul_dtype)
        w_folded = w_folded.astype(matmul_dtype)

    # Stack per-channel params into one small grid-invariant ref: row 0 = bias, row 1 = alpha.
    params = jnp.stack([bias, alpha_p], axis=0).astype(jnp.float32)   # (2, C_pad)

    # ---- Row tiling: tm must be a multiple of 8, or equal the full row extent M. ----
    # No input padding: Pallas masks the partial last block (pl.cdiv grid).
    if M <= tile_m:
        tm = M
    else:
        tm = max(8, (tile_m // 8) * 8)
    grid = (pl.cdiv(M, tm),)

    out2 = pl.pallas_call(
        _dimconvert_kernel,
        out_shape=jax.ShapeDtypeStruct((M, C_pad), out_dtype),
        grid_spec=pl.GridSpec(
            grid=grid,
            in_specs=[
                pl.BlockSpec((tm, C_in), lambda i: (i, 0)),      # x row tile
                pl.BlockSpec((C_in, C_pad), lambda i: (0, 0)),   # folded conv weight (grid-invariant)
                pl.BlockSpec((2, C_pad), lambda i: (0, 0)),      # [bias; alpha] (grid-invariant)
            ],
            out_specs=pl.BlockSpec((tm, C_pad), lambda i: (i, 0)),
        ),
        compiler_params=pltpu.CompilerParams(
            dimension_semantics=("parallel",)),
    )(x2, w_folded, params)

    if C_pad != C_out:
        out2 = out2[:, :C_out]
    return out2.reshape(B, T, C_out)


def _reference(x, w, gamma, beta, mean, var, alpha, eps=1e-5):
    y = jnp.einsum("btc,cd->btd", x, w)
    y = (y - mean) * jax.lax.rsqrt(var + eps) * gamma + beta
    return jnp.where(y >= 0.0, y, alpha * y)


if __name__ == "__main__":
    key = jax.random.PRNGKey(0)
    k_x, k_w, k_x2 = jax.random.split(key, 3)

    B, T = 2, 8
    C_in, C_out = 32, 64

    x = jax.random.normal(k_x, (B, T, C_in), dtype=jnp.float32)

    # Conv1d weight in PyTorch is (C_out, C_in, 1); we store it as (C_in, C_out).
    w = (jax.random.normal(k_w, (C_in, C_out), dtype=jnp.float32)
         / jnp.sqrt(jnp.float32(C_in)))

    # BatchNorm1d / PReLU(out_channels) default initialization (deterministic).
    gamma = jnp.ones((C_out,), jnp.float32)
    beta = jnp.zeros((C_out,), jnp.float32)
    running_mean = jnp.zeros((C_out,), jnp.float32)
    running_var = jnp.ones((C_out,), jnp.float32)
    alpha = jnp.full((C_out,), 0.25, jnp.float32)   # PReLU default

    ref = _reference(x, w, gamma, beta, running_mean, running_var, alpha)

    # f32 path, single full-extent row block: tight correctness check.
    out = dim_convert(x, w, gamma, beta, running_mean, running_var, alpha)
    out = jax.block_until_ready(out)
    assert out.shape == (B, T, C_out)
    assert jnp.allclose(out, ref, atol=1e-5, rtol=1e-5)

    # Multi-tile + partial-last-block path (tile_m forced small; M=18 not divisible by 8).
    B2, T2 = 2, 9
    x_odd = jax.random.normal(k_x2, (B2, T2, C_in), dtype=jnp.float32)
    ref_odd = _reference(x_odd, w, gamma, beta, running_mean, running_var, alpha)
    out_odd = dim_convert(x_odd, w, gamma, beta, running_mean, running_var, alpha,
                          tile_m=8)
    out_odd = jax.block_until_ready(out_odd)
    assert out_odd.shape == (B2, T2, C_out)
    assert jnp.allclose(out_odd, ref_odd, atol=1e-5, rtol=1e-5)

    # bf16-operand path (v6e/v7x mem-bandwidth optimization): looser tolerance.
    out_bf16 = dim_convert(x, w, gamma, beta, running_mean, running_var, alpha,
                           matmul_dtype=jnp.bfloat16)
    out_bf16 = jax.block_until_ready(out_bf16)
    assert out_bf16.shape == (B, T, C_out)
    assert jnp.allclose(out_bf16, ref, atol=1e-1, rtol=1e-1)

    print("KERNEL_OK")
</pallas_src>

<mosaic_0001>
module attributes {stable_mosaic.version = 11 : i64} {
  func.func @_dimconvert_kernel(%arg0: i32, %arg1: memref<16x32xf32, #tpu.memory_space<vmem>>, %arg2: memref<32x128xf32, #tpu.memory_space<vmem>>, %arg3: memref<2x128xf32, #tpu.memory_space<vmem>>, %arg4: memref<16x128xf32, #tpu.memory_space<vmem>>) attributes {dimension_semantics = [#tpu.dimension_semantics<parallel>], iteration_bounds = array<i64: 1>, scalar_prefetch = 0 : i64, scratch_operands = 0 : i64, tpu.core_type = #tpu.core_type<tc>, window_params = [{transform_indices = @transform_0, window_bounds = array<i64: 16, 32>}, {pipeline_mode = #tpu.pipeline_mode<synchronous>, transform_indices = @transform_1, window_bounds = array<i64: 32, 128>}, {pipeline_mode = #tpu.pipeline_mode<synchronous>, transform_indices = @transform_2, window_bounds = array<i64: 2, 128>}, {transform_indices = @transform_3, window_bounds = array<i64: 16, 128>}]} {
    %c0 = arith.constant 0 : index
    %c0_0 = arith.constant 0 : index
    %0 = vector.load %arg1[%c0, %c0_0] : memref<16x32xf32, #tpu.memory_space<vmem>>, vector<16x32xf32>
    %c0_1 = arith.constant 0 : index
    %c0_2 = arith.constant 0 : index
    %1 = vector.load %arg2[%c0_1, %c0_2] : memref<32x128xf32, #tpu.memory_space<vmem>>, vector<32x128xf32>
    %cst = arith.constant dense<0.000000e+00> : vector<16x128xf32>
    %2 = tpu.matmul %0, %1, %cst {dimension_numbers = #tpu.dot_dimension_numbers<[1], [0], [0], [1], [0, 0, 1, 1], [], []>} : vector<16x32xf32>, vector<32x128xf32>, vector<16x128xf32> -> vector<16x128xf32>
    %c0_3 = arith.constant 0 : index
    %c0_4 = arith.constant 0 : index
    %3 = vector.load %arg3[%c0_3, %c0_4] : memref<2x128xf32, #tpu.memory_space<vmem>>, vector<2x128xf32>
    %4 = vector.extract_strided_slice %3 {offsets = [0, 0], sizes = [1, 128], strides = [1, 1]} : vector<2x128xf32> to vector<1x128xf32>
    %5 = vector.extract_strided_slice %3 {offsets = [1, 0], sizes = [1, 128], strides = [1, 1]} : vector<2x128xf32> to vector<1x128xf32>
    %6 = vector.broadcast %4 : vector<1x128xf32> to vector<16x128xf32>
    %7 = arith.addf %2, %6 : vector<16x128xf32>
    %cst_5 = arith.constant 0.000000e+00 : f32
    %8 = vector.broadcast %cst_5 : f32 to vector<16x128xf32>
    %9 = arith.cmpf oge, %7, %8 : vector<16x128xf32>
    %10 = vector.broadcast %5 : vector<1x128xf32> to vector<16x128xf32>
    %11 = arith.mulf %10, %7 : vector<16x128xf32>
    %12 = arith.select %9, %7, %11 : vector<16x128xi1>, vector<16x128xf32>
    %c0_6 = arith.constant 0 : index
    %c0_7 = arith.constant 0 : index
    %13 = vector.load %arg4[%c0_6, %c0_7] : memref<16x128xf32, #tpu.memory_space<vmem>>, vector<16x128xf32>
    tpu.vector_store %arg4[%c0_6, %c0_7], %12 {strides = array<i32>} : memref<16x128xf32, #tpu.memory_space<vmem>>, vector<16x128xf32>,
    return
  }
  func.func @transform_0(%arg0: i32) -> (i32, i32) {
    %c0_i32 = arith.constant 0 : i32
    %c0_i32_0 = arith.constant 0 : i32
    return %arg0, %c0_i32 : i32, i32
  }
  func.func @transform_1(%arg0: i32) -> (i32, i32) {
    %c0_i32 = arith.constant 0 : i32
    %c0_i32_0 = arith.constant 0 : i32
    %c0_i32_1 = arith.constant 0 : i32
    return %c0_i32, %c0_i32_0 : i32, i32
  }
  func.func @transform_2(%arg0: i32) -> (i32, i32) {
    %c0_i32 = arith.constant 0 : i32
    %c0_i32_0 = arith.constant 0 : i32
    %c0_i32_1 = arith.constant 0 : i32
    return %c0_i32, %c0_i32_0 : i32, i32
  }
  func.func @transform_3(%arg0: i32) -> (i32, i32) {
    %c0_i32 = arith.constant 0 : i32
    %c0_i32_0 = arith.constant 0 : i32
    return %arg0, %c0_i32 : i32, i32
  }
}

</mosaic_0001>

<llo_original>
// kernel: tpu_custom_call.1
$region0: #{tpu_custom_call.1}
  #allocation0 [shape = 'u32[]', space=smem, size = 0x4, offset = 0x4, fixed_abs, tag = 'smem constant byte address 0x4 - core index']
  #allocation1 [shape = 'u32[72,128]{1,0:T(1,128)}', space=vmem, size = 0x9000, scoped, tag = 'internal scratch']
  %s0 = inlined_call_operand.hbm [shape: f32[16,32], index: 0, kind: input, shape index: {}]
  %s1 = inlined_call_operand.hbm [shape: f32[32,128], index: 1, kind: input, shape index: {}]
  %s2 = inlined_call_operand.hbm [shape: f32[2,128], index: 2, kind: input, shape index: {}]
  %s3 = inlined_call_operand.hbm [shape: f32[16,128], index: 3, kind: output, shape index: {}]
  %s4 = sld [smem:[#allocation0]]
  $region34: #{tpu_custom_call.1} parent=0
    _
  %s6 = ssub.s32 1, %s4
  %s7 = scalar_select 0, %s6, %s4
  $region1: #{tpu_custom_call.1} parent=0
    #allocation2 [shape = 'u8[8192]{0}', space=vmem, size = 0x2000, scoped, tag = 'input window, operand 0, single buffered']
    #allocation3 [shape = 's32[1]{0}', space=sflag, size = 0x4, scoped, tag = 'scoped memory for tpu_custom_call.1']
    #allocation4 [shape = 's32[1]{0}', space=sflag, size = 0x4, scoped, tag = 'scoped memory for tpu_custom_call.1']
    #allocation5 [shape = 'u8[16384]{0}', space=vmem, size = 0x4000, scoped, tag = 'input window, operand 1, single buffered']
    #allocation6 [shape = 's32[1]{0}', space=sflag, size = 0x4, scoped, tag = 'scoped memory for tpu_custom_call.1']
    #allocation7 [shape = 'u8[1024]{0}', space=vmem, size = 0x400, scoped, tag = 'input window, operand 2, single buffered']
    #allocation8 [shape = 'u8[8192]{0}', space=vmem, size = 0x2000, scoped, tag = 'output window, operand 0, single buffered']
    %8 = vsyncpa [#allocation3], 0
    %9 = vsyncpa [#allocation6], 0
    %10 = vsyncpa [#allocation4], 0
    // Predicated region
    $region2: #{tpu_custom_call.1} parent=1 // pred_check
      _
    $region3: #{tpu_custom_call.1} parent=1 // pred_check_branch
      %12 = sbr.rel (0) target = $region5
    $region4: #{tpu_custom_call.1} parent=1 // pred_region
      %14 = vsyncadd [#allocation3], 0
      %s15 = sshll.u32 %s0, 4
      %s16 = int_to_ptr.hbm [resolvable:$true] %s15
      %s17 = sshll.u32 [#allocation2], 4
      %s18 = int_to_ptr.vmem [resolvable:$true] %s17
      %23 = dma.hbm_to_vmem [thread:$0]  %s16, 256, %s18, [#allocation3], 128, 128, 8
    $region5: #{tpu_custom_call.1} parent=1 // pred_fallthru
      _
    // Predicated region
    $region6: #{tpu_custom_call.1} parent=1 // pred_check
      _
    $region7: #{tpu_custom_call.1} parent=1 // pred_check_branch
      %25 = sbr.rel (0) target = $region9
    $region8: #{tpu_custom_call.1} parent=1 // pred_region
      %27 = vsyncadd [#allocation6], 0
      %s28 = sshll.u32 %s1, 4
      %s29 = int_to_ptr.hbm [resolvable:$true] %s28
      %s30 = sshll.u32 [#allocation5], 4
      %s31 = int_to_ptr.vmem [resolvable:$true] %s30
      %36 = dma.hbm_to_vmem [thread:$0]  %s29, 512, %s31, [#allocation6], 128, 128, 8
    $region9: #{tpu_custom_call.1} parent=1 // pred_fallthru
      _
    // Predicated region
    $region10: #{tpu_custom_call.1} parent=1 // pred_check
      _
    $region11: #{tpu_custom_call.1} parent=1 // pred_check_branch
      %38 = sbr.rel (0) target = $region13
    $region12: #{tpu_custom_call.1} parent=1 // pred_region
      %40 = vsyncadd [#allocation6], 0
      %s42 = sshll.u32 %s2, 4
      %s43 = int_to_ptr.hbm [resolvable:$true] %s42
      %s44 = sshll.u32 [#allocation7], 4
      %s45 = int_to_ptr.vmem [resolvable:$true] %s44
      %47 = dma.hbm_to_vmem [thread:$0]  %s43, 32, %s45, [#allocation6]
    $region13: #{tpu_custom_call.1} parent=1 // pred_fallthru
      _
    // Predicated region
    $region14: #{tpu_custom_call.1} parent=1 // pred_check
      _
    $region15: #{tpu_custom_call.1} parent=1 // pred_check_branch
      %49 = sbr.rel (0) target = $region17
    $region16: #{tpu_custom_call.1} parent=1 // pred_region
      %51 = dma.done [#allocation3], 256
    $region17: #{tpu_custom_call.1} parent=1 // pred_fallthru
      _
    // Predicated region
    $region18: #{tpu_custom_call.1} parent=1 // pred_check
      _
    $region19: #{tpu_custom_call.1} parent=1 // pred_check_branch
      %53 = sbr.rel (0) target = $region21
    $region20: #{tpu_custom_call.1} parent=1 // pred_region
      %55 = dma.done [#allocation6], 512
    $region21: #{tpu_custom_call.1} parent=1 // pred_fallthru
      _
    // Predicated region
    $region22: #{tpu_custom_call.1} parent=1 // pred_check
      _
    $region23: #{tpu_custom_call.1} parent=1 // pred_check_branch
      %57 = sbr.rel (0) target = $region25
    $region24: #{tpu_custom_call.1} parent=1 // pred_region
      %59 = dma.done [#allocation6], 32
    $region25: #{tpu_custom_call.1} parent=1 // pred_fallthru
      _
    %v60 = vld [vmem:[#allocation2] sm:$0xff]
    %v61 = vld [vmem:[#allocation2 + $0x8] sm:$0xff]
    %v62 = vld [vmem:[#allocation5] sm:$0xff]
    %v63 = vld [vmem:[#allocation5 + $0x8] sm:$0xff]
    %v64 = vld [vmem:[#allocation5 + $0x10] sm:$0xff]
    %v65 = vld [vmem:[#allocation5 + $0x18] sm:$0xff]
    %v66 = vld [vmem:[#allocation7] sm:$0x3]
    %v67 = vperm.slane %v66, 0
    %vm68 = vcmask 261120
    %v70 = vsel %vm68, %v60, 0
    %v73 = vsel %vm68, %v61, 0
    %75 = vmatpush.msra.mxu0 0.0
    %76 = vmatpush.msra.mxu0 0.0
    %77 = vmatpush.msra.mxu0 0.0
    %78 = vmatpush.msra.mxu0 0.0
    %79 = vmatpush.msra.mxu0 0.0
    %80 = vmatpush.msra.mxu0 0.0
    %81 = vmatpush.msra.mxu0 0.0
    %82 = vmatpush.msra.mxu0 0.0
    %83 = vmatpush.msra.mxu0 0.0
    %84 = vmatpush.msra.mxu0 0.0
    %85 = vmatpush.msra.mxu0 0.0
    %86 = vmatpush.msra.mxu0 0.0
    %87 = vmatpush.msra.mxu0 %v65
    %88 = vmatpush.msra.mxu0 %v64
    %89 = vmatpush.msra.mxu0 %v63
    %90 = vmatpush.msra.mxu0 %v62
    %91 = vmatmul.f32.gmra.mxu0 %v70
    %v92 = vpop.f32.mrf.mxu0
    %v93 = vadd.f32 %v67, %v92
    %94 = vmatmul.f32.gmra.mxu0 %v73
    %v95 = vpop.f32.mrf.mxu0
    %v96 = vadd.f32 %v67, %v95
    %97 = vdwg.mxu0
    %vm98 = vcmp.ge.f32.partialorder %v93, 0.0
    %vm99 = vcmp.ge.f32.partialorder %v96, 0.0
    %v100 = vperm.slane %v66, 1
    %v101 = vmul.f32 %v100, %v93
    %v102 = vmul.f32 %v100, %v96
    %v103 = vsel %vm98, %v93, %v101
    %v104 = vsel %vm99, %v96, %v102
    %105 = vst [vmem:[#allocation8] sm:$0xff] %v103
    %106 = vst [vmem:[#allocation8 + $0x8] sm:$0xff] %v104
    // Predicated region
    $region26: #{tpu_custom_call.1} parent=1 // pred_check
      _
    $region27: #{tpu_custom_call.1} parent=1 // pred_check_branch
      %108 = sbr.rel (0) target = $region29
    $region28: #{tpu_custom_call.1} parent=1 // pred_region
      %110 = vsyncadd [#allocation4], 0
      %s111 = sshll.u32 [#allocation8], 4
      %s112 = int_to_ptr.vmem [resolvable:$true] %s111
      %s113 = sshll.u32 %s3, 4
      %s114 = int_to_ptr.hbm [resolvable:$true] %s113
      %119 = dma.vmem_to_hbm [thread:$0]  %s112, 256, %s114, [#allocation4], 128, 128, 8
    $region29: #{tpu_custom_call.1} parent=1 // pred_fallthru
      _
    // Predicated region
    $region30: #{tpu_custom_call.1} parent=1 // pred_check
      _
    $region31: #{tpu_custom_call.1} parent=1 // pred_check_branch
      %121 = sbr.rel (0) target = $region33
    $region32: #{tpu_custom_call.1} parent=1 // pred_region
      %123 = dma.done [#allocation4], 256
    $region33: #{tpu_custom_call.1} parent=1 // pred_fallthru
      _
    %124 = vsyncpa [#allocation3], 1
    %125 = vsyncpa [#allocation6], 1
    %126 = vsyncpa [#allocation4], 1

</llo_original>
